<compile_context>
chip_gen: v7x
topology: tpu7x:2x2x1
jax: 0.10.0
libtpu: 0.0.40
codegen_flags: <defaults>
</compile_context>

<pallas_src>
import functools

import jax
import jax.numpy as jnp
from jax.experimental import pallas as pl
from jax.experimental.pallas import tpu as pltpu


# ----------------------------- Pallas kernel --------------------------------

def _context_encoder_kernel(x_ref,
                            w1_ref, b1_ref, a1_ref,
                            w2_ref, b2_ref, a2_ref,
                            w3_ref, b3_ref,
                            o_ref):
    x = x_ref[...]                                              # (bm, C) f32

    # Fused layer 1 of both branches (block-diagonal Linear) + per-column PReLU
    h = jnp.dot(x, w1_ref[...], preferred_element_type=jnp.float32) + b1_ref[...]
    h = jnp.where(h > 0, h, a1_ref[...] * h)                    # Dropout -> id (eval)

    # Fused layer 2 + per-column PReLU
    h = jnp.dot(h, w2_ref[...], preferred_element_type=jnp.float32) + b2_ref[...]
    h = jnp.where(h > 0, h, a2_ref[...] * h)
    # BatchNorm1d (eval) of each branch is already folded into w3/b3; Dropout -> id

    # Fused layer 3 writes [fc(raw) | fc2(maps)] directly -> no wrapper concat
    o_ref[...] = (jnp.dot(h, w3_ref[...], preferred_element_type=jnp.float32)
                  + b3_ref[...]).astype(o_ref.dtype)


# ----------------------------- wrapper / prep -------------------------------

def _round_up(n, m):
    return ((n + m - 1) // m) * m


def _choose_bm(b_padded, bm_cap):
    # Big tiles amortize the ~0.35us/grid-step overhead and fill MXU rows; but
    # keep >=2 grid steps for big batches so ("parallel",) can shard the batch
    # across both TensorCores on v7x. (v5e/v6e have 1 TC; 1-2 steps is fine.)
    if b_padded <= 256:
        return b_padded
    bm = _round_up(pl.cdiv(b_padded, 2), 128)
    return max(8, min(bm, bm_cap, b_padded))


def _fold_bn_into_linear(w, b, gamma, beta, mean, var, eps=1e-5):
    # Eval BatchNorm1d followed by Linear:
    #   ((h-mean)/sqrt(var+eps)*gamma + beta) @ w + b
    #   = h @ (scale[:,None]*w) + (shift @ w + b),  exact in f32.
    scale = gamma / jnp.sqrt(var + eps)
    shift = beta - mean * scale
    return scale[:, None] * w, shift @ w + b


def _block_diag(a, b):
    m, n = a.shape
    p, q = b.shape
    out = jnp.zeros((m + p, n + q), jnp.float32)
    out = out.at[:m, :n].set(a)
    out = out.at[m:, n:].set(b)
    return out


def fuse_params(params, eps=1e-5):
    """One-time (load-time) prep: fold eval BN into each branch's last Linear and
    fuse the two branches into block-diagonal layers. Exact: [raw, maps] @
    blockdiag(w, v) == [raw@w, maps@v]."""
    w3f, b3f = _fold_bn_into_linear(params["w3"], params["b3"],
                                    params["bn1_gamma"], params["bn1_beta"],
                                    params["bn1_mean"], params["bn1_var"], eps)
    v3f, c3f = _fold_bn_into_linear(params["v3"], params["c3"],
                                    params["bn2_gamma"], params["bn2_beta"],
                                    params["bn2_mean"], params["bn2_var"], eps)

    n1, n2 = params["w1"].shape[1], params["v1"].shape[1]   # 64, 16
    m1, m2 = params["w2"].shape[1], params["v2"].shape[1]   # 32, 16

    def avec(a, n):
        return jnp.broadcast_to(jnp.asarray(a, jnp.float32), (n,))

    return {
        "W1": _block_diag(params["w1"], params["v1"]),                     # (C, 80)
        "B1": jnp.concatenate([params["b1"], params["c1"]])[None, :],      # (1, 80)
        "A1": jnp.concatenate([avec(params["a1"], n1),
                               avec(params["a3"], n2)])[None, :],          # (1, 80)
        "W2": _block_diag(params["w2"], params["v2"]),                     # (80, 48)
        "B2": jnp.concatenate([params["b2"], params["c2"]])[None, :],      # (1, 48)
        "A2": jnp.concatenate([avec(params["a2"], m1),
                               avec(params["a4"], m2)])[None, :],          # (1, 48)
        "W3": _block_diag(w3f, v3f),                                       # (48, ctx+8)
        "B3": jnp.concatenate([b3f, c3f])[None, :],                        # (1, ctx+8)
    }


def context_encoder_forward(x, fused, *, bm_cap=2048):
    """ContextMLP_withMaps_larger eval forward as one fused Pallas kernel.

    x: (B, num_mri_raw + num_maps) float32 -> (B, context_size + 8) float32.
    """
    B, C = x.shape
    W1, B1, A1 = fused["W1"], fused["B1"], fused["A1"]
    W2, B2, A2 = fused["W2"], fused["B2"], fused["A2"]
    W3, B3 = fused["W3"], fused["B3"]
    assert W1.shape[0] == C
    h1, h2, dout = W1.shape[1], W2.shape[1], W3.shape[1]

    b_pad = _round_up(B, 8)
    if b_pad != B:
        x = jnp.pad(x, ((0, b_pad - B), (0, 0)))
    bm = _choose_bm(b_pad, bm_cap)
    grid = (pl.cdiv(b_pad, bm),)

    def pinned(shape):
        # weights/biases: same block every grid step (stay resident in VMEM)
        return pl.BlockSpec(shape, lambda i: (0, 0))

    out = pl.pallas_call(
        _context_encoder_kernel,
        out_shape=jax.ShapeDtypeStruct((b_pad, dout), jnp.float32),
        grid_spec=pltpu.PrefetchScalarGridSpec(
            num_scalar_prefetch=0,
            grid=grid,
            in_specs=[
                pl.BlockSpec((bm, C), lambda i: (i, 0)),    # full x tile (no wrapper slice)
                pinned((C, h1)), pinned((1, h1)), pinned((1, h1)),
                pinned((h1, h2)), pinned((1, h2)), pinned((1, h2)),
                pinned((h2, dout)), pinned((1, dout)),
            ],
            out_specs=pl.BlockSpec((bm, dout), lambda i: (i, 0)),
        ),
        # No vmem_limit_bytes on purpose: even bm=2048 keeps all double-buffered
        # blocks well under the default scoped-VMEM limit on every generation.
        compiler_params=pltpu.CompilerParams(
            dimension_semantics=("parallel",)),
    )(x, W1, B1, A1, W2, B2, A2, W3, B3)

    return out[:B] if b_pad != B else out


def combined_mlp_forward(samples, num_samples, x, fused):
    """CombinedMLP_withMaps_larger.forward: Pallas context encoding + repeat.
    Returns the repeated conditioning context (what would feed the flow)."""
    del samples  # used only by the flow KLD below
    context = context_encoder_forward(x, fused)
    context_rep = jnp.repeat(context, num_samples, axis=0)   # torch.repeat_interleave
    # TODO(synk): flow_model.forward_kld (normflows MaskedAffineAutoregressive +
    # LULinearPermute + DiagGaussian log-prob) is external-library internals with
    # no clean Pallas translation here; the KLD loss itself is not computed.
    return context_rep


# --------------------------- params / reference -----------------------------

def init_params(key, num_mri_raw, num_maps, context_size):
    ks = jax.random.split(key, 6)

    def lin(k, fan_in, fan_out):
        bound = 1.0 / jnp.sqrt(fan_in)
        kw, kb = jax.random.split(k)
        w = jax.random.uniform(kw, (fan_in, fan_out), jnp.float32, -bound, bound)
        b = jax.random.uniform(kb, (fan_out,), jnp.float32, -bound, bound)
        return w, b

    w1, b1 = lin(ks[0], num_mri_raw, 64)
    w2, b2 = lin(ks[1], 64, 32)
    w3, b3 = lin(ks[2], 32, context_size)
    v1, c1 = lin(ks[3], num_maps, 16)
    v2, c2 = lin(ks[4], 16, 16)
    v3, c3 = lin(ks[5], 16, 8)
    return {
        "w1": w1, "b1": b1, "w2": w2, "b2": b2, "w3": w3, "b3": b3,
        "v1": v1, "c1": c1, "v2": v2, "c2": c2, "v3": v3, "c3": c3,
        # PReLU shared alphas (PyTorch default is 0.25; distinct values here to
        # exercise every branch of the fused kernel).
        "a1": jnp.array(0.25, jnp.float32), "a2": jnp.array(0.10, jnp.float32),
        "a3": jnp.array(0.30, jnp.float32), "a4": jnp.array(0.05, jnp.float32),
        # Eval-mode BatchNorm1d affine + nonzero running stats.
        "bn1_gamma": 1.0 + 0.1 * jnp.arange(32, dtype=jnp.float32) / 32.0,
        "bn1_beta": 0.05 * jnp.arange(32, dtype=jnp.float32) / 32.0,
        "bn1_mean": 0.1 * jnp.arange(32, dtype=jnp.float32) / 32.0,
        "bn1_var": 1.0 + 0.05 * jnp.arange(32, dtype=jnp.float32) / 32.0,
        "bn2_gamma": jnp.full((16,), 0.9, jnp.float32),
        "bn2_beta": jnp.full((16,), 0.02, jnp.float32),
        "bn2_mean": 0.05 * jnp.arange(16, dtype=jnp.float32) / 16.0,
        "bn2_var": 1.0 + 0.03 * jnp.arange(16, dtype=jnp.float32) / 16.0,
    }


def reference_jax(x, num_mri_raw, params, eps=1e-5):
    raw, maps = x[:, :num_mri_raw], x[:, num_mri_raw:]

    def prelu(h, a):
        return jnp.where(h > 0, h, a * h)

    def bn(h, g, b, m, v):
        return (h - m) / jnp.sqrt(v + eps) * g + b

    h = prelu(raw @ params["w1"] + params["b1"], params["a1"])
    h = prelu(h @ params["w2"] + params["b2"], params["a2"])
    h = bn(h, params["bn1_gamma"], params["bn1_beta"],
           params["bn1_mean"], params["bn1_var"])
    x1 = h @ params["w3"] + params["b3"]

    g = prelu(maps @ params["v1"] + params["c1"], params["a3"])
    g = prelu(g @ params["v2"] + params["c2"], params["a4"])
    g = bn(g, params["bn2_gamma"], params["bn2_beta"],
           params["bn2_mean"], params["bn2_var"])
    x2 = g @ params["v3"] + params["c3"]

    return jnp.concatenate([x1, x2], axis=1)


# --------------------------------- demo --------------------------------------

if __name__ == "__main__":
    key = jax.random.PRNGKey(0)
    k_x, k_x2, k_p, k_s = jax.random.split(key, 4)

    batch = 8
    num_mri_raw = 8
    num_maps = 4
    num_channels = num_mri_raw + num_maps
    context_size = 16
    num_samples = 4

    x = jax.random.normal(k_x, (batch, num_channels), jnp.float32)
    samples = jax.random.normal(k_s, (batch * num_samples, 2), jnp.float32)
    params = init_params(k_p, num_mri_raw, num_maps, context_size)
    fused = fuse_params(params)

    # Small-batch path (single grid step).
    context = jax.block_until_ready(context_encoder_forward(x, fused))
    ref = reference_jax(x, num_mri_raw, params)
    assert context.shape == (batch, context_size + 8)
    assert jnp.allclose(context, ref, atol=1e-4, rtol=1e-4)

    # Larger batch exercises the tiled multi-step grid (>=2 parallel steps,
    # partial last block masked by Pallas).
    x_big = jax.random.normal(k_x2, (384, num_channels), jnp.float32)
    out_big = jax.block_until_ready(context_encoder_forward(x_big, fused))
    ref_big = reference_jax(x_big, num_mri_raw, params)
    assert out_big.shape == (384, context_size + 8)
    assert jnp.allclose(out_big, ref_big, atol=1e-4, rtol=1e-4)

    # CombinedMLP forward glue (context repeat for the conditional flow).
    context_rep = jax.block_until_ready(
        combined_mlp_forward(samples, num_samples, x, fused))
    assert context_rep.shape == (batch * num_samples, context_size + 8)

    print("KERNEL_OK")
</pallas_src>

<mosaic_0001>
module attributes {stable_mosaic.version = 11 : i64} {
  func.func @_context_encoder_kernel(%arg0: i32, %arg1: memref<8x12xf32, #tpu.memory_space<vmem>>, %arg2: memref<12x80xf32, #tpu.memory_space<vmem>>, %arg3: memref<1x80xf32, #tpu.memory_space<vmem>>, %arg4: memref<1x80xf32, #tpu.memory_space<vmem>>, %arg5: memref<80x48xf32, #tpu.memory_space<vmem>>, %arg6: memref<1x48xf32, #tpu.memory_space<vmem>>, %arg7: memref<1x48xf32, #tpu.memory_space<vmem>>, %arg8: memref<48x24xf32, #tpu.memory_space<vmem>>, %arg9: memref<1x24xf32, #tpu.memory_space<vmem>>, %arg10: memref<8x24xf32, #tpu.memory_space<vmem>>) attributes {dimension_semantics = [#tpu.dimension_semantics<parallel>], iteration_bounds = array<i64: 1>, scalar_prefetch = 0 : i64, scratch_operands = 0 : i64, tpu.core_type = #tpu.core_type<tc>, window_params = [{transform_indices = @transform_0, window_bounds = array<i64: 8, 12>}, {pipeline_mode = #tpu.pipeline_mode<synchronous>, transform_indices = @transform_1, window_bounds = array<i64: 12, 80>}, {pipeline_mode = #tpu.pipeline_mode<synchronous>, transform_indices = @transform_2, window_bounds = array<i64: 1, 80>}, {pipeline_mode = #tpu.pipeline_mode<synchronous>, transform_indices = @transform_3, window_bounds = array<i64: 1, 80>}, {pipeline_mode = #tpu.pipeline_mode<synchronous>, transform_indices = @transform_4, window_bounds = array<i64: 80, 48>}, {pipeline_mode = #tpu.pipeline_mode<synchronous>, transform_indices = @transform_5, window_bounds = array<i64: 1, 48>}, {pipeline_mode = #tpu.pipeline_mode<synchronous>, transform_indices = @transform_6, window_bounds = array<i64: 1, 48>}, {pipeline_mode = #tpu.pipeline_mode<synchronous>, transform_indices = @transform_7, window_bounds = array<i64: 48, 24>}, {pipeline_mode = #tpu.pipeline_mode<synchronous>, transform_indices = @transform_8, window_bounds = array<i64: 1, 24>}, {transform_indices = @transform_9, window_bounds = array<i64: 8, 24>}]} {
    %c0 = arith.constant 0 : index
    %c0_0 = arith.constant 0 : index
    %0 = vector.load %arg1[%c0, %c0_0] : memref<8x12xf32, #tpu.memory_space<vmem>>, vector<8x12xf32>
    %c0_1 = arith.constant 0 : index
    %c0_2 = arith.constant 0 : index
    %1 = vector.load %arg2[%c0_1, %c0_2] : memref<12x80xf32, #tpu.memory_space<vmem>>, vector<12x80xf32>
    %cst = arith.constant dense<0.000000e+00> : vector<8x80xf32>
    %2 = tpu.matmul %0, %1, %cst {dimension_numbers = #tpu.dot_dimension_numbers<[1], [0], [0], [1], [0, 0, 1, 1], [], []>} : vector<8x12xf32>, vector<12x80xf32>, vector<8x80xf32> -> vector<8x80xf32>
    %c0_3 = arith.constant 0 : index
    %c0_4 = arith.constant 0 : index
    %3 = vector.load %arg3[%c0_3, %c0_4] : memref<1x80xf32, #tpu.memory_space<vmem>>, vector<1x80xf32>
    %4 = vector.broadcast %3 : vector<1x80xf32> to vector<8x80xf32>
    %5 = arith.addf %2, %4 : vector<8x80xf32>
    %cst_5 = arith.constant 0.000000e+00 : f32
    %6 = vector.broadcast %cst_5 : f32 to vector<8x80xf32>
    %7 = arith.cmpf ogt, %5, %6 : vector<8x80xf32>
    %c0_6 = arith.constant 0 : index
    %c0_7 = arith.constant 0 : index
    %8 = vector.load %arg4[%c0_6, %c0_7] : memref<1x80xf32, #tpu.memory_space<vmem>>, vector<1x80xf32>
    %9 = vector.broadcast %8 : vector<1x80xf32> to vector<8x80xf32>
    %10 = arith.mulf %9, %5 : vector<8x80xf32>
    %11 = arith.select %7, %5, %10 : vector<8x80xi1>, vector<8x80xf32>
    %c0_8 = arith.constant 0 : index
    %c0_9 = arith.constant 0 : index
    %12 = vector.load %arg5[%c0_8, %c0_9] : memref<80x48xf32, #tpu.memory_space<vmem>>, vector<80x48xf32>
    %cst_10 = arith.constant dense<0.000000e+00> : vector<8x48xf32>
    %13 = tpu.matmul %11, %12, %cst_10 {dimension_numbers = #tpu.dot_dimension_numbers<[1], [0], [0], [1], [0, 0, 1, 1], [], []>} : vector<8x80xf32>, vector<80x48xf32>, vector<8x48xf32> -> vector<8x48xf32>
    %c0_11 = arith.constant 0 : index
    %c0_12 = arith.constant 0 : index
    %14 = vector.load %arg6[%c0_11, %c0_12] : memref<1x48xf32, #tpu.memory_space<vmem>>, vector<1x48xf32>
    %15 = vector.broadcast %14 : vector<1x48xf32> to vector<8x48xf32>
    %16 = arith.addf %13, %15 : vector<8x48xf32>
    %cst_13 = arith.constant 0.000000e+00 : f32
    %17 = vector.broadcast %cst_13 : f32 to vector<8x48xf32>
    %18 = arith.cmpf ogt, %16, %17 : vector<8x48xf32>
    %c0_14 = arith.constant 0 : index
    %c0_15 = arith.constant 0 : index
    %19 = vector.load %arg7[%c0_14, %c0_15] : memref<1x48xf32, #tpu.memory_space<vmem>>, vector<1x48xf32>
    %20 = vector.broadcast %19 : vector<1x48xf32> to vector<8x48xf32>
    %21 = arith.mulf %20, %16 : vector<8x48xf32>
    %22 = arith.select %18, %16, %21 : vector<8x48xi1>, vector<8x48xf32>
    %c0_16 = arith.constant 0 : index
    %c0_17 = arith.constant 0 : index
    %23 = vector.load %arg8[%c0_16, %c0_17] : memref<48x24xf32, #tpu.memory_space<vmem>>, vector<48x24xf32>
    %cst_18 = arith.constant dense<0.000000e+00> : vector<8x24xf32>
    %24 = tpu.matmul %22, %23, %cst_18 {dimension_numbers = #tpu.dot_dimension_numbers<[1], [0], [0], [1], [0, 0, 1, 1], [], []>} : vector<8x48xf32>, vector<48x24xf32>, vector<8x24xf32> -> vector<8x24xf32>
    %c0_19 = arith.constant 0 : index
    %c0_20 = arith.constant 0 : index
    %25 = vector.load %arg9[%c0_19, %c0_20] : memref<1x24xf32, #tpu.memory_space<vmem>>, vector<1x24xf32>
    %26 = vector.broadcast %25 : vector<1x24xf32> to vector<8x24xf32>
    %27 = arith.addf %24, %26 : vector<8x24xf32>
    %c0_21 = arith.constant 0 : index
    %c0_22 = arith.constant 0 : index
    %28 = vector.load %arg10[%c0_21, %c0_22] : memref<8x24xf32, #tpu.memory_space<vmem>>, vector<8x24xf32>
    tpu.vector_store %arg10[%c0_21, %c0_22], %27 {strides = array<i32>} : memref<8x24xf32, #tpu.memory_space<vmem>>, vector<8x24xf32>,
    return
  }
  func.func @transform_0(%arg0: i32) -> (i32, i32) {
    %c0_i32 = arith.constant 0 : i32
    %c0_i32_0 = arith.constant 0 : i32
    return %arg0, %c0_i32 : i32, i32
  }
  func.func @transform_1(%arg0: i32) -> (i32, i32) {
    %c0_i32 = arith.constant 0 : i32
    %c0_i32_0 = arith.constant 0 : i32
    %c0_i32_1 = arith.constant 0 : i32
    return %c0_i32, %c0_i32_0 : i32, i32
  }
  func.func @transform_2(%arg0: i32) -> (i32, i32) {
    %c0_i32 = arith.constant 0 : i32
    %c0_i32_0 = arith.constant 0 : i32
    %c0_i32_1 = arith.constant 0 : i32
    return %c0_i32, %c0_i32_0 : i32, i32
  }
  func.func @transform_3(%arg0: i32) -> (i32, i32) {
    %c0_i32 = arith.constant 0 : i32
    %c0_i32_0 = arith.constant 0 : i32
    %c0_i32_1 = arith.constant 0 : i32
    return %c0_i32, %c0_i32_0 : i32, i32
  }
  func.func @transform_4(%arg0: i32) -> (i32, i32) {
    %c0_i32 = arith.constant 0 : i32
    %c0_i32_0 = arith.constant 0 : i32
    %c0_i32_1 = arith.constant 0 : i32
    return %c0_i32, %c0_i32_0 : i32, i32
  }
  func.func @transform_5(%arg0: i32) -> (i32, i32) {
    %c0_i32 = arith.constant 0 : i32
    %c0_i32_0 = arith.constant 0 : i32
    %c0_i32_1 = arith.constant 0 : i32
    return %c0_i32, %c0_i32_0 : i32, i32
  }
  func.func @transform_6(%arg0: i32) -> (i32, i32) {
    %c0_i32 = arith.constant 0 : i32
    %c0_i32_0 = arith.constant 0 : i32
    %c0_i32_1 = arith.constant 0 : i32
    return %c0_i32, %c0_i32_0 : i32, i32
  }
  func.func @transform_7(%arg0: i32) -> (i32, i32) {
    %c0_i32 = arith.constant 0 : i32
    %c0_i32_0 = arith.constant 0 : i32
    %c0_i32_1 = arith.constant 0 : i32
    return %c0_i32, %c0_i32_0 : i32, i32
  }
  func.func @transform_8(%arg0: i32) -> (i32, i32) {
    %c0_i32 = arith.constant 0 : i32
    %c0_i32_0 = arith.constant 0 : i32
    %c0_i32_1 = arith.constant 0 : i32
    return %c0_i32, %c0_i32_0 : i32, i32
  }
  func.func @transform_9(%arg0: i32) -> (i32, i32) {
    %c0_i32 = arith.constant 0 : i32
    %c0_i32_0 = arith.constant 0 : i32
    return %arg0, %c0_i32 : i32, i32
  }
}

</mosaic_0001>

<llo_original>
// kernel: tpu_custom_call.1
$region0: #{tpu_custom_call.1}
  #allocation0 [shape = 'u32[]', space=smem, size = 0x4, offset = 0x4, fixed_abs, tag = 'smem constant byte address 0x4 - core index']
  #allocation1 [shape = 'u32[144,128]{1,0:T(1,128)}', space=vmem, size = 0x12000, scoped, tag = 'internal scratch']
  %s0 = inlined_call_operand.vmem [shape: f32[8,12], index: 0, kind: input, shape index: {}]
  %s1 = inlined_call_operand.vmem [shape: f32[12,80], index: 1, kind: input, shape index: {}]
  %s2 = inlined_call_operand.vmem [shape: f32[1,80], index: 2, kind: input, shape index: {}]
  %s3 = inlined_call_operand.vmem [shape: f32[1,80], index: 3, kind: input, shape index: {}]
  %s4 = inlined_call_operand.vmem [shape: f32[80,48], index: 4, kind: input, shape index: {}]
  %s5 = inlined_call_operand.vmem [shape: f32[1,48], index: 5, kind: input, shape index: {}]
  %s6 = inlined_call_operand.vmem [shape: f32[1,48], index: 6, kind: input, shape index: {}]
  %s7 = inlined_call_operand.vmem [shape: f32[48,24], index: 7, kind: input, shape index: {}]
  %s8 = inlined_call_operand.vmem [shape: f32[1,24], index: 8, kind: input, shape index: {}]
  %s9 = inlined_call_operand.hbm [shape: f32[8,24], index: 9, kind: output, shape index: {}]
  %s10 = sld [smem:[#allocation0]]
  $region46: #{tpu_custom_call.1} parent=0
    _
  %s12 = ssub.s32 1, %s10
  %s13 = scalar_select 0, %s12, %s10
  $region1: #{tpu_custom_call.1} parent=0
    #allocation2 [shape = 'u8[4096]{0}', space=vmem, size = 0x1000, scoped, tag = 'output window, operand 0, single buffered']
    #allocation3 [shape = 's32[1]{0}', space=sflag, size = 0x4, scoped, tag = 'scoped memory for tpu_custom_call.1']
    %14 = vsyncpa [#allocation3], 0
    // Predicated region
    $region2: #{tpu_custom_call.1} parent=1 // pred_check
      _
    $region3: #{tpu_custom_call.1} parent=1 // pred_check_branch
      %16 = sbr.rel (0) target = $region5
    $region4: #{tpu_custom_call.1} parent=1 // pred_region
      _
    $region5: #{tpu_custom_call.1} parent=1 // pred_fallthru
      _
    // Predicated region
    $region6: #{tpu_custom_call.1} parent=1 // pred_check
      _
    $region7: #{tpu_custom_call.1} parent=1 // pred_check_branch
      %18 = sbr.rel (0) target = $region9
    $region8: #{tpu_custom_call.1} parent=1 // pred_region
      _
    $region9: #{tpu_custom_call.1} parent=1 // pred_fallthru
      _
    // Predicated region
    $region10: #{tpu_custom_call.1} parent=1 // pred_check
      _
    $region11: #{tpu_custom_call.1} parent=1 // pred_check_branch
      %20 = sbr.rel (0) target = $region13
    $region12: #{tpu_custom_call.1} parent=1 // pred_region
      _
    $region13: #{tpu_custom_call.1} parent=1 // pred_fallthru
      _
    // Predicated region
    $region14: #{tpu_custom_call.1} parent=1 // pred_check
      _
    $region15: #{tpu_custom_call.1} parent=1 // pred_check_branch
      %22 = sbr.rel (0) target = $region17
    $region16: #{tpu_custom_call.1} parent=1 // pred_region
      _
    $region17: #{tpu_custom_call.1} parent=1 // pred_fallthru
      _
    // Predicated region
    $region18: #{tpu_custom_call.1} parent=1 // pred_check
      _
    $region19: #{tpu_custom_call.1} parent=1 // pred_check_branch
      %24 = sbr.rel (0) target = $region21
    $region20: #{tpu_custom_call.1} parent=1 // pred_region
      _
    $region21: #{tpu_custom_call.1} parent=1 // pred_fallthru
      _
    // Predicated region
    $region22: #{tpu_custom_call.1} parent=1 // pred_check
      _
    $region23: #{tpu_custom_call.1} parent=1 // pred_check_branch
      %26 = sbr.rel (0) target = $region25
    $region24: #{tpu_custom_call.1} parent=1 // pred_region
      _
    $region25: #{tpu_custom_call.1} parent=1 // pred_fallthru
      _
    // Predicated region
    $region26: #{tpu_custom_call.1} parent=1 // pred_check
      _
    $region27: #{tpu_custom_call.1} parent=1 // pred_check_branch
      %28 = sbr.rel (0) target = $region29
    $region28: #{tpu_custom_call.1} parent=1 // pred_region
      _
    $region29: #{tpu_custom_call.1} parent=1 // pred_fallthru
      _
    // Predicated region
    $region30: #{tpu_custom_call.1} parent=1 // pred_check
      _
    $region31: #{tpu_custom_call.1} parent=1 // pred_check_branch
      %30 = sbr.rel (0) target = $region33
    $region32: #{tpu_custom_call.1} parent=1 // pred_region
      _
    $region33: #{tpu_custom_call.1} parent=1 // pred_fallthru
      _
    // Predicated region
    $region34: #{tpu_custom_call.1} parent=1 // pred_check
      _
    $region35: #{tpu_custom_call.1} parent=1 // pred_check_branch
      %32 = sbr.rel (0) target = $region37
    $region36: #{tpu_custom_call.1} parent=1 // pred_region
      _
    $region37: #{tpu_custom_call.1} parent=1 // pred_fallthru
      _
    %v33 = vld [vmem:[%s0] sm:$0xff]
    %v34 = vld [vmem:[%s1] sm:$0xff]
    %v35 = vld [vmem:[%s1 + $0x8] sm:$0xf]
    %v36 = vld [vmem:[%s2] sm:$0x1]
    %v38 = vlaneseq
    %v39 = vshrl.u32 %v38, 7
    %v40 = vsub.s32 0, %v39
    %v41 = vrot.slane %v36, %v40
    %vm43 = vcmask 97280
    %v45 = vsel %vm43, %v33, 0
    %vm47 = vcmask 1043456
    %v49 = vsel %vm47, %v35, 0
    %51 = vmatprep.subr.mxu0 0.0
    %52 = vmatpush1.msra.mxu0 %v34
    %53 = vmatprep.subr.mxu0 0.0
    %54 = vmatpush1.msra.mxu0 %v49
    %55 = vmatprep.subr.mxu0 0.0
    %56 = vmatpush1.msra.mxu0 0.0
    %57 = vmatprep.subr.mxu0 0.0
    %58 = vmatpush1.msra.mxu0 0.0
    %59 = vmatprep.subr.mxu0 0.0
    %60 = vmatpush1.msra.mxu0 0.0
    %61 = vmatprep.subr.mxu0 0.0
    %62 = vmatpush1.msra.mxu0 0.0
    %63 = vmatprep.subr.mxu0 0.0
    %64 = vmatpush1.msra.mxu0 0.0
    %65 = vmatprep.subr.mxu0 0.0
    %66 = vmatpush1.msra.mxu0 0.0
    %67 = vmatprep.subr.mxu0 0.0
    %68 = vmatpush1.msra.mxu0 0.0
    %69 = vmatprep.subr.mxu0 0.0
    %70 = vmatpush1.msra.mxu0 0.0
    %71 = vmatprep.subr.mxu0 0.0
    %72 = vmatpush1.msra.mxu0 0.0
    %73 = vmatprep.subr.mxu0 0.0
    %74 = vmatpush1.msra.mxu0 0.0
    %75 = vmatprep.subr.mxu0 0.0
    %76 = vmatpush1.msra.mxu0 0.0
    %77 = vmatprep.subr.mxu0 0.0
    %78 = vmatpush1.msra.mxu0 0.0
    %79 = vmatprep.subr.mxu0 0.0
    %80 = vmatpush1.msra.mxu0 0.0
    %81 = vmatprep.subr.mxu0 0.0
    %82 = vmatpush1.msra.mxu0 0.0
    %83 = vmatprep.subr.mxu0 0.0
    %84 = vmatpush1.msra.mxu0 0.0
    %85 = vmatprep.subr.mxu0 0.0
    %86 = vmatpush1.msra.mxu0 0.0
    %87 = vmatprep.subr.mxu0 0.0
    %88 = vmatpush1.msra.mxu0 0.0
    %89 = vmatprep.subr.mxu0 0.0
    %90 = vmatpush1.msra.mxu0 0.0
    %91 = vmatprep.subr.mxu0 0.0
    %92 = vmatpush1.msra.mxu0 0.0
    %93 = vmatprep.subr.mxu0 0.0
    %94 = vmatpush1.msra.mxu0 0.0
    %95 = vmatprep.subr.mxu0 0.0
    %96 = vmatpush1.msra.mxu0 0.0
    %97 = vmatprep.subr.mxu0 0.0
    %98 = vmatpush1.msra.mxu0 0.0
    %99 = vmatprep.subr.mxu0 0.0
    %100 = vmatpush1.msra.mxu0 0.0
    %101 = vmatprep.subr.mxu0 0.0
    %102 = vmatpush1.msra.mxu0 0.0
    %103 = vmatprep.subr.mxu0 0.0
    %104 = vmatpush1.msra.mxu0 0.0
    %105 = vmatprep.subr.mxu0 0.0
    %106 = vmatpush1.msra.mxu0 0.0
    %107 = vmatprep.subr.mxu0 0.0
    %108 = vmatpush1.msra.mxu0 0.0
    %109 = vmatprep.subr.mxu0 0.0
    %110 = vmatpush1.msra.mxu0 0.0
    %111 = vmatprep.subr.mxu0 0.0
    %112 = vmatpush1.msra.mxu0 0.0
    %113 = vmatprep.subr.mxu0 0.0
    %114 = vmatpush1.msra.mxu0 0.0
    %115 = vmatprep.mubr.f32.mxu0 0.0
    %116 = vmatmul.mubr.f32.gmra.mrb[0].mxu0 %v45
    %v117 = vpop.f32.mrb[0].mxu0
    %v118 = vadd.f32 %v41, %v117
    %v119 = vpop.f32.mrb[0].mxu0
    %120 = vdwg.mxu0
    %vm121 = vcmp.gt.f32.partialorder %v118, 0.0
    %v122 = vld [vmem:[%s3] sm:$0x1]
    %v124 = vlaneseq
    %v125 = vshrl.u32 %v124, 7
    %v126 = vsub.s32 0, %v125
    %v127 = vrot.slane %v122, %v126
    %v129 = vmul.f32 %v127, %v118
    %v130 = vsel %vm121, %v118, %v129
    %v131 = vld [vmem:[%s4] sm:$0xff]
    %v132 = vld [vmem:[%s4 + $0x8] sm:$0xff]
    %v133 = vld [vmem:[%s4 + $0x10] sm:$0xff]
    %v134 = vld [vmem:[%s4 + $0x18] sm:$0xff]
    %v135 = vld [vmem:[%s4 + $0x20] sm:$0xff]
    %v136 = vld [vmem:[%s4 + $0x28] sm:$0xff]
    %v137 = vld [vmem:[%s4 + $0x30] sm:$0xff]
    %v138 = vld [vmem:[%s4 + $0x38] sm:$0xff]
    %v139 = vld [vmem:[%s4 + $0x40] sm:$0xff]
    %v140 = vld [vmem:[%s4 + $0x48] sm:$0xff]
    %v141 = vld [vmem:[%s5] sm:$0x1]
    %v143 = vlaneseq
    %v144 = vshrl.u32 %v143, 7
    %v145 = vsub.s32 0, %v144
    %v146 = vrot.slane %v141, %v145
    %vm148 = vcmask 654336
    %v150 = vsel %vm148, %v130, 0
    %152 = vmatprep.subr.mxu0 0.0
    %153 = vmatpush1.msra.mxu0 %v131
    %154 = vmatprep.subr.mxu0 0.0
    %155 = vmatpush1.msra.mxu0 %v132
    %156 = vmatprep.subr.mxu0 0.0
    %157 = vmatpush1.msra.mxu0 %v133
    %158 = vmatprep.subr.mxu0 0.0
    %159 = vmatpush1.msra.mxu0 %v134
    %160 = vmatprep.subr.mxu0 0.0
    %161 = vmatpush1.msra.mxu0 %v135
    %162 = vmatprep.subr.mxu0 0.0
    %163 = vmatpush1.msra.mxu0 %v136
    %164 = vmatprep.subr.mxu0 0.0
    %165 = vmatpush1.msra.mxu0 %v137
    %166 = vmatprep.subr.mxu0 0.0
    %167 = vmatpush1.msra.mxu0 %v138
    %168 = vmatprep.subr.mxu0 0.0
    %169 = vmatpush1.msra.mxu0 %v139
    %170 = vmatprep.subr.mxu0 0.0
    %171 = vmatpush1.msra.mxu0 %v140
    %172 = vmatprep.subr.mxu0 0.0
    %173 = vmatpush1.msra.mxu0 0.0
    %174 = vmatprep.subr.mxu0 0.0
    %175 = vmatpush1.msra.mxu0 0.0
    %176 = vmatprep.subr.mxu0 0.0
    %177 = vmatpush1.msra.mxu0 0.0
    %178 = vmatprep.subr.mxu0 0.0
    %179 = vmatpush1.msra.mxu0 0.0
    %180 = vmatprep.subr.mxu0 0.0
    %181 = vmatpush1.msra.mxu0 0.0
    %182 = vmatprep.subr.mxu0 0.0
    %183 = vmatpush1.msra.mxu0 0.0
    %184 = vmatprep.subr.mxu0 0.0
    %185 = vmatpush1.msra.mxu0 0.0
    %186 = vmatprep.subr.mxu0 0.0
    %187 = vmatpush1.msra.mxu0 0.0
    %188 = vmatprep.subr.mxu0 0.0
    %189 = vmatpush1.msra.mxu0 0.0
    %190 = vmatprep.subr.mxu0 0.0
    %191 = vmatpush1.msra.mxu0 0.0
    %192 = vmatprep.subr.mxu0 0.0
    %193 = vmatpush1.msra.mxu0 0.0
    %194 = vmatprep.subr.mxu0 0.0
    %195 = vmatpush1.msra.mxu0 0.0
    %196 = vmatprep.subr.mxu0 0.0
    %197 = vmatpush1.msra.mxu0 0.0
    %198 = vmatprep.subr.mxu0 0.0
    %199 = vmatpush1.msra.mxu0 0.0
    %200 = vmatprep.subr.mxu0 0.0
    %201 = vmatpush1.msra.mxu0 0.0
    %202 = vmatprep.subr.mxu0 0.0
    %203 = vmatpush1.msra.mxu0 0.0
    %204 = vmatprep.subr.mxu0 0.0
    %205 = vmatpush1.msra.mxu0 0.0
    %206 = vmatprep.subr.mxu0 0.0
    %207 = vmatpush1.msra.mxu0 0.0
    %208 = vmatprep.subr.mxu0 0.0
    %209 = vmatpush1.msra.mxu0 0.0
    %210 = vmatprep.subr.mxu0 0.0
    %211 = vmatpush1.msra.mxu0 0.0
    %212 = vmatprep.subr.mxu0 0.0
    %213 = vmatpush1.msra.mxu0 0.0
    %214 = vmatprep.subr.mxu0 0.0
    %215 = vmatpush1.msra.mxu0 0.0
    %216 = vmatprep.mubr.f32.mxu0 0.0
    %217 = vmatmul.mubr.f32.gmra.mrb[0].mxu0 %v150
    %v218 = vpop.f32.mrb[0].mxu0
    %v219 = vadd.f32 %v146, %v218
    %v220 = vpop.f32.mrb[0].mxu0
    %221 = vdwg.mxu0
    %vm222 = vcmp.gt.f32.partialorder %v219, 0.0
    %v223 = vld [vmem:[%s6] sm:$0x1]
    %v225 = vlaneseq
    %v226 = vshrl.u32 %v225, 7
    %v227 = vsub.s32 0, %v226
    %v228 = vrot.slane %v223, %v227
    %v230 = vmul.f32 %v228, %v219
    %v231 = vsel %vm222, %v219, %v230
    %v232 = vld [vmem:[%s7] sm:$0xff]
    %v233 = vld [vmem:[%s7 + $0x8] sm:$0xff]
    %v234 = vld [vmem:[%s7 + $0x10] sm:$0xff]
    %v235 = vld [vmem:[%s7 + $0x18] sm:$0xff]
    %v236 = vld [vmem:[%s7 + $0x20] sm:$0xff]
    %v237 = vld [vmem:[%s7 + $0x28] sm:$0xff]
    %v238 = vld [vmem:[%s8] sm:$0x1]
    %v240 = vlaneseq
    %v241 = vshrl.u32 %v240, 7
    %v242 = vsub.s32 0, %v241
    %v243 = vrot.slane %v238, %v242
    %vm245 = vcmask 392192
    %v247 = vsel %vm245, %v231, 0
    %249 = vmatprep.subr.mxu0 0.0
    %250 = vmatpush1.msra.mxu0 %v232
    %251 = vmatprep.subr.mxu0 0.0
    %252 = vmatpush1.msra.mxu0 %v233
    %253 = vmatprep.subr.mxu0 0.0
    %254 = vmatpush1.msra.mxu0 %v234
    %255 = vmatprep.subr.mxu0 0.0
    %256 = vmatpush1.msra.mxu0 %v235
    %257 = vmatprep.subr.mxu0 0.0
    %258 = vmatpush1.msra.mxu0 %v236
    %259 = vmatprep.subr.mxu0 0.0
    %260 = vmatpush1.msra.mxu0 %v237
    %261 = vmatprep.subr.mxu0 0.0
    %262 = vmatpush1.msra.mxu0 0.0
    %263 = vmatprep.subr.mxu0 0.0
    %264 = vmatpush1.msra.mxu0 0.0
    %265 = vmatprep.subr.mxu0 0.0
    %266 = vmatpush1.msra.mxu0 0.0
    %267 = vmatprep.subr.mxu0 0.0
    %268 = vmatpush1.msra.mxu0 0.0
    %269 = vmatprep.subr.mxu0 0.0
    %270 = vmatpush1.msra.mxu0 0.0
    %271 = vmatprep.subr.mxu0 0.0
    %272 = vmatpush1.msra.mxu0 0.0
    %273 = vmatprep.subr.mxu0 0.0
    %274 = vmatpush1.msra.mxu0 0.0
    %275 = vmatprep.subr.mxu0 0.0
    %276 = vmatpush1.msra.mxu0 0.0
    %277 = vmatprep.subr.mxu0 0.0
    %278 = vmatpush1.msra.mxu0 0.0
    %279 = vmatprep.subr.mxu0 0.0
    %280 = vmatpush1.msra.mxu0 0.0
    %281 = vmatprep.subr.mxu0 0.0
    %282 = vmatpush1.msra.mxu0 0.0
    %283 = vmatprep.subr.mxu0 0.0
    %284 = vmatpush1.msra.mxu0 0.0
    %285 = vmatprep.subr.mxu0 0.0
    %286 = vmatpush1.msra.mxu0 0.0
    %287 = vmatprep.subr.mxu0 0.0
    %288 = vmatpush1.msra.mxu0 0.0
    %289 = vmatprep.subr.mxu0 0.0
    %290 = vmatpush1.msra.mxu0 0.0
    %291 = vmatprep.subr.mxu0 0.0
    %292 = vmatpush1.msra.mxu0 0.0
    %293 = vmatprep.subr.mxu0 0.0
    %294 = vmatpush1.msra.mxu0 0.0
    %295 = vmatprep.subr.mxu0 0.0
    %296 = vmatpush1.msra.mxu0 0.0
    %297 = vmatprep.subr.mxu0 0.0
    %298 = vmatpush1.msra.mxu0 0.0
    %299 = vmatprep.subr.mxu0 0.0
    %300 = vmatpush1.msra.mxu0 0.0
    %301 = vmatprep.subr.mxu0 0.0
    %302 = vmatpush1.msra.mxu0 0.0
    %303 = vmatprep.subr.mxu0 0.0
    %304 = vmatpush1.msra.mxu0 0.0
    %305 = vmatprep.subr.mxu0 0.0
    %306 = vmatpush1.msra.mxu0 0.0
    %307 = vmatprep.subr.mxu0 0.0
    %308 = vmatpush1.msra.mxu0 0.0
    %309 = vmatprep.subr.mxu0 0.0
    %310 = vmatpush1.msra.mxu0 0.0
    %311 = vmatprep.subr.mxu0 0.0
    %312 = vmatpush1.msra.mxu0 0.0
    %313 = vmatprep.mubr.f32.mxu0 0.0
    %314 = vmatmul.mubr.f32.gmra.mrb[0].mxu0 %v247
    %v315 = vpop.f32.mrb[0].mxu0
    %v316 = vadd.f32 %v243, %v315
    %v317 = vpop.f32.mrb[0].mxu0
    %318 = vdwg.mxu0
    %vm319 = vcmask 195584
    %320 = vst.msk [vmem:[#allocation2] sm:$0xff] %vm319, %v316
    // Predicated region
    $region38: #{tpu_custom_call.1} parent=1 // pred_check
      _
    $region39: #{tpu_custom_call.1} parent=1 // pred_check_branch
      %322 = sbr.rel (0) target = $region41
    $region40: #{tpu_custom_call.1} parent=1 // pred_region
      %s324 = ssub.s32 128, 128
      %325 = vsyncadd [#allocation3], %s324
      %s327 = sshll.u32 [#allocation2], 4
      %s328 = int_to_ptr.vmem [resolvable:$true] %s327
      %330 = dma.vmem_to_hbm [thread:$0]  %s328, 128, %s9, [#allocation3]
    $region41: #{tpu_custom_call.1} parent=1 // pred_fallthru
      _
    // Predicated region
    $region42: #{tpu_custom_call.1} parent=1 // pred_check
      _
    $region43: #{tpu_custom_call.1} parent=1 // pred_check_branch
      %332 = sbr.rel (0) target = $region45
    $region44: #{tpu_custom_call.1} parent=1 // pred_region
      %333 = dma.done [#allocation3], 128
    $region45: #{tpu_custom_call.1} parent=1 // pred_fallthru
      _
    %334 = vsyncpa [#allocation3], 1

</llo_original>
